<compile_context>
chip_gen: v7x
topology: tpu7x:2x2x1
jax: 0.10.0
libtpu: 0.0.40
codegen_flags: <defaults>
</compile_context>

<pallas_src>
import functools

import jax
import jax.numpy as jnp
from jax.experimental import pallas as pl
from jax.experimental.pallas import tpu as pltpu


def _round_up(x, m):
    return ((x + m - 1) // m) * m


def _conv_pool_kernel(x_ref, halo_ref, w_ref, scale_ref, shift_ref, o_ref,
                      y_scratch, *, K, R, TP, pool_k, pool_s):
    """One (batch, L-tile) grid step.

    x_ref:     (1, TL, C_in)        main input rows of this tile
    halo_ref:  (1, H, C_in)         first H rows past the tile (conv/pool halo)
    w_ref:     (K, C_in, C_out_p)   conv weights, tap-major (resident)
    scale_ref: (1, C_out_p)         folded BN scale (resident)
    shift_ref: (1, C_out_p)         folded BN shift incl. conv bias (resident)
    o_ref:     (1, TP, C_out_p)     pooled output rows of this tile
    y_scratch: (R, C_out_p)         post-ELU conv rows (for strided pool reads)
    """
    # Main rows + halo rows -> one (TL + H, C_in) window source.  Concat is on
    # the sublane axis at an 8-aligned offset (TL % 8 == 0), so it is cheap.
    xw = jnp.concatenate([x_ref[0], halo_ref[0]], axis=0)

    # --- Conv1d (stride=1): K tap-matmuls accumulated in f32 on the MXU. ---
    acc = jnp.dot(xw[0:R, :], w_ref[0], preferred_element_type=jnp.float32)
    for k in range(1, K):
        acc = acc + jnp.dot(xw[k:k + R, :], w_ref[k],
                            preferred_element_type=jnp.float32)

    # --- BatchNorm1d (inference, folded) + conv bias, then ELU (alpha=1). ---
    y = acc * scale_ref[...] + shift_ref[...]
    y = jnp.where(y > 0, y, jnp.exp(jnp.minimum(y, 0.0)) - 1.0)
    y_scratch[...] = y

    # --- MaxPool1d(pool_k, pool_s) along the length (sublane) axis. ---
    pooled = y_scratch[pl.ds(0, TP, stride=pool_s), :]
    for j in range(1, pool_k):
        pooled = jnp.maximum(pooled, y_scratch[pl.ds(j, TP, stride=pool_s), :])

    o_ref[0] = pooled.astype(o_ref.dtype)


def conv_pool_forward(x, weight, bias, gamma, beta, running_mean, running_var,
                      *, conv_stride=1, pool_k=3, pool_s=3, eps=1e-5,
                      matmul_dtype=jnp.bfloat16, tile_pooled_rows=512):
    """x: (B, C_in, L) PyTorch NCL layout.  Returns (B, C_out, L_pool) f32."""
    assert conv_stride == 1  # TODO(synk): conv_stride > 1 not implemented.
    B, C_in, L = x.shape
    C_out, _, K = weight.shape
    L_out = (L - K) // conv_stride + 1
    L_pool = (L_out - pool_k) // pool_s + 1
    assert L_out >= 1 and L_pool >= 1

    # ---------------- Tile geometry ----------------
    halo_need = max(pool_k - pool_s, 0) + (K - 1)      # extra conv-input rows
    H = max(8, _round_up(max(halo_need, 1), 8))        # halo block (8-aligned)
    # TP = pooled rows per tile; multiple of H so TP % 8 == 0 and TL % H == 0.
    TP = min(_round_up(L_pool, H), _round_up(tile_pooled_rows, H))
    TL = TP * pool_s                                   # conv rows per tile
    R = (TP - 1) * pool_s + pool_k                     # conv rows actually used
    n_l = -(-L_pool // TP)                             # number of L tiles
    L_pool_pad = n_l * TP
    L_in_pad = max(L, n_l * TL + H)                    # all blocks in-bounds
    C_out_p = _round_up(C_out, 128)                    # lane-dense channels

    # ---------------- Wrapper-side layout prep ----------------
    x_t = jnp.transpose(x, (0, 2, 1))                                # (B, L, C_in)
    x_t = jnp.pad(x_t, ((0, 0), (0, L_in_pad - L), (0, 0))).astype(matmul_dtype)
    w_t = jnp.transpose(weight, (2, 1, 0))                           # (K, C_in, C_out)
    w_t = jnp.pad(w_t, ((0, 0), (0, 0), (0, C_out_p - C_out))).astype(matmul_dtype)

    # Fold BN (inference) + conv bias:  y = scale * conv(x) + shift
    scale = (gamma / jnp.sqrt(running_var + eps)).astype(jnp.float32)
    shift = (beta + scale * (bias - running_mean)).astype(jnp.float32)
    scale = jnp.pad(scale, (0, C_out_p - C_out)).reshape(1, C_out_p)
    shift = jnp.pad(shift, (0, C_out_p - C_out)).reshape(1, C_out_p)

    kernel = functools.partial(_conv_pool_kernel, K=K, R=R, TP=TP,
                               pool_k=pool_k, pool_s=pool_s)

    tl_blk = TL // H  # halo block index stride (element offset (l+1)*TL)

    out = pl.pallas_call(
        kernel,
        out_shape=jax.ShapeDtypeStruct((B, L_pool_pad, C_out_p), jnp.float32),
        grid_spec=pltpu.PrefetchScalarGridSpec(
            num_scalar_prefetch=0,
            grid=(B, n_l),
            in_specs=[
                # main tile rows [l*TL, (l+1)*TL)
                pl.BlockSpec((1, TL, C_in), lambda b, l: (b, l, 0)),
                # halo rows [(l+1)*TL, (l+1)*TL + H)   (same array, 2nd view)
                pl.BlockSpec((1, H, C_in), lambda b, l: (b, (l + 1) * tl_blk, 0)),
                # resident weights / folded BN params
                pl.BlockSpec((K, C_in, C_out_p), lambda b, l: (0, 0, 0)),
                pl.BlockSpec((1, C_out_p), lambda b, l: (0, 0)),
                pl.BlockSpec((1, C_out_p), lambda b, l: (0, 0)),
            ],
            out_specs=pl.BlockSpec((1, TP, C_out_p), lambda b, l: (b, l, 0)),
            scratch_shapes=[pltpu.VMEM((R, C_out_p), jnp.float32)],
        ),
        compiler_params=pltpu.CompilerParams(
            dimension_semantics=("parallel", "parallel"),
            vmem_limit_bytes=32 * 1024 * 1024),
    )(x_t, x_t, w_t, scale, shift)

    out = out[:, :L_pool, :C_out]                      # drop tile/lane padding
    return jnp.transpose(out, (0, 2, 1))               # (B, C_out, L_pool)


def conv_pool_reference(x, weight, bias, gamma, beta, running_mean, running_var,
                        *, pool_k=3, pool_s=3, eps=1e-5):
    """Pure-JAX reference for validation (same inference-BN semantics)."""
    y = jax.lax.conv_general_dilated(
        x, weight, window_strides=(1,), padding="VALID",
        dimension_numbers=("NCH", "OIH", "NCH"))
    y = y + bias[None, :, None]
    y = (gamma[None, :, None] * (y - running_mean[None, :, None])
         / jnp.sqrt(running_var[None, :, None] + eps) + beta[None, :, None])
    y = jnp.where(y > 0, y, jnp.exp(y) - 1.0)
    L_out = y.shape[-1]
    L_pool = (L_out - pool_k) // pool_s + 1
    windows = jnp.stack(
        [y[..., j:j + (L_pool - 1) * pool_s + 1:pool_s] for j in range(pool_k)],
        axis=0)
    return jnp.max(windows, axis=0)


if __name__ == "__main__":
    key = jax.random.PRNGKey(0)
    B, C_in, C_out, L, K = 2, 4, 8, 64, 5

    ks = jax.random.split(key, 7)
    x = jax.random.normal(ks[0], (B, C_in, L), jnp.float32)
    weight = 0.1 * jax.random.normal(ks[1], (C_out, C_in, K), jnp.float32)
    bias = 0.1 * jax.random.normal(ks[2], (C_out,), jnp.float32)
    gamma = 1.0 + 0.1 * jax.random.normal(ks[3], (C_out,), jnp.float32)
    beta = 0.1 * jax.random.normal(ks[4], (C_out,), jnp.float32)
    running_mean = 0.1 * jax.random.normal(ks[5], (C_out,), jnp.float32)
    running_var = jnp.abs(jax.random.normal(ks[6], (C_out,), jnp.float32)) + 0.5

    ref = conv_pool_reference(x, weight, bias, gamma, beta,
                              running_mean, running_var)

    # f32 MXU path: exact against the pure-JAX reference.
    out_f32 = conv_pool_forward(x, weight, bias, gamma, beta,
                                running_mean, running_var,
                                matmul_dtype=jnp.float32)
    out_f32 = jax.block_until_ready(out_f32)
    assert out_f32.shape == ref.shape, (out_f32.shape, ref.shape)
    assert jnp.allclose(out_f32, ref, atol=1e-4, rtol=1e-4)

    # bf16 MXU path (default): feeds the MXU at its rated bf16 throughput.
    out_bf16 = conv_pool_forward(x, weight, bias, gamma, beta,
                                 running_mean, running_var)
    out_bf16 = jax.block_until_ready(out_bf16)
    assert out_bf16.shape == ref.shape, (out_bf16.shape, ref.shape)
    assert jnp.allclose(out_bf16, ref, atol=5e-2, rtol=5e-2)

    print("KERNEL_OK")
</pallas_src>

<mosaic_0001>
module attributes {stable_mosaic.version = 11 : i64} {
  func.func @_conv_pool_kernel(%arg0: i32, %arg1: i32, %arg2: memref<1x72x4xf32, #tpu.memory_space<vmem>>, %arg3: memref<1x8x4xf32, #tpu.memory_space<vmem>>, %arg4: memref<5x4x128xf32, #tpu.memory_space<vmem>>, %arg5: memref<1x128xf32, #tpu.memory_space<vmem>>, %arg6: memref<1x128xf32, #tpu.memory_space<vmem>>, %arg7: memref<1x24x128xf32, #tpu.memory_space<vmem>>, %arg8: memref<72x128xf32, #tpu.memory_space<vmem>>) attributes {dimension_semantics = [#tpu.dimension_semantics<parallel>, #tpu.dimension_semantics<parallel>], iteration_bounds = array<i64: 2, 1>, scalar_prefetch = 0 : i64, scratch_operands = 1 : i64, tpu.core_type = #tpu.core_type<tc>, window_params = [{transform_indices = @transform_0, window_bounds = array<i64: 1, 72, 4>}, {transform_indices = @transform_1, window_bounds = array<i64: 1, 8, 4>}, {pipeline_mode = #tpu.pipeline_mode<synchronous>, transform_indices = @transform_2, window_bounds = array<i64: 5, 4, 128>}, {pipeline_mode = #tpu.pipeline_mode<synchronous>, transform_indices = @transform_3, window_bounds = array<i64: 1, 128>}, {pipeline_mode = #tpu.pipeline_mode<synchronous>, transform_indices = @transform_4, window_bounds = array<i64: 1, 128>}, {transform_indices = @transform_5, window_bounds = array<i64: 1, 24, 128>}]} {
    %c0 = arith.constant 0 : index
    %c0_0 = arith.constant 0 : index
    %c0_1 = arith.constant 0 : index
    %0 = vector.load %arg2[%c0, %c0_0, %c0_1] : memref<1x72x4xf32, #tpu.memory_space<vmem>>, vector<1x72x4xf32>
    %1 = vector.shape_cast %0 : vector<1x72x4xf32> to vector<72x4xf32>
    %c0_2 = arith.constant 0 : index
    %c0_3 = arith.constant 0 : index
    %c0_4 = arith.constant 0 : index
    %2 = vector.load %arg3[%c0_2, %c0_3, %c0_4] : memref<1x8x4xf32, #tpu.memory_space<vmem>>, vector<1x8x4xf32>
    %3 = vector.shape_cast %2 : vector<1x8x4xf32> to vector<8x4xf32>
    %4 = tpu.concatenate %1, %3 in 0 : vector<72x4xf32>, vector<8x4xf32> -> vector<80x4xf32>
    %5 = vector.extract_strided_slice %4 {offsets = [0, 0], sizes = [72, 4], strides = [1, 1]} : vector<80x4xf32> to vector<72x4xf32>
    %c0_5 = arith.constant 0 : index
    %c0_6 = arith.constant 0 : index
    %c0_7 = arith.constant 0 : index
    %6 = vector.load %arg4[%c0_5, %c0_6, %c0_7] : memref<5x4x128xf32, #tpu.memory_space<vmem>>, vector<1x4x128xf32>
    %7 = vector.shape_cast %6 : vector<1x4x128xf32> to vector<4x128xf32>
    %cst = arith.constant dense<0.000000e+00> : vector<72x128xf32>
    %8 = tpu.matmul %5, %7, %cst {dimension_numbers = #tpu.dot_dimension_numbers<[1], [0], [0], [1], [0, 0, 1, 1], [], []>} : vector<72x4xf32>, vector<4x128xf32>, vector<72x128xf32> -> vector<72x128xf32>
    %9 = vector.extract_strided_slice %4 {offsets = [1, 0], sizes = [72, 4], strides = [1, 1]} : vector<80x4xf32> to vector<72x4xf32>
    %c1 = arith.constant 1 : index
    %c0_8 = arith.constant 0 : index
    %c0_9 = arith.constant 0 : index
    %10 = vector.load %arg4[%c1, %c0_8, %c0_9] : memref<5x4x128xf32, #tpu.memory_space<vmem>>, vector<1x4x128xf32>
    %11 = vector.shape_cast %10 : vector<1x4x128xf32> to vector<4x128xf32>
    %cst_10 = arith.constant dense<0.000000e+00> : vector<72x128xf32>
    %12 = tpu.matmul %9, %11, %cst_10 {dimension_numbers = #tpu.dot_dimension_numbers<[1], [0], [0], [1], [0, 0, 1, 1], [], []>} : vector<72x4xf32>, vector<4x128xf32>, vector<72x128xf32> -> vector<72x128xf32>
    %13 = arith.addf %8, %12 : vector<72x128xf32>
    %14 = vector.extract_strided_slice %4 {offsets = [2, 0], sizes = [72, 4], strides = [1, 1]} : vector<80x4xf32> to vector<72x4xf32>
    %c2 = arith.constant 2 : index
    %c0_11 = arith.constant 0 : index
    %c0_12 = arith.constant 0 : index
    %15 = vector.load %arg4[%c2, %c0_11, %c0_12] : memref<5x4x128xf32, #tpu.memory_space<vmem>>, vector<1x4x128xf32>
    %16 = vector.shape_cast %15 : vector<1x4x128xf32> to vector<4x128xf32>
    %cst_13 = arith.constant dense<0.000000e+00> : vector<72x128xf32>
    %17 = tpu.matmul %14, %16, %cst_13 {dimension_numbers = #tpu.dot_dimension_numbers<[1], [0], [0], [1], [0, 0, 1, 1], [], []>} : vector<72x4xf32>, vector<4x128xf32>, vector<72x128xf32> -> vector<72x128xf32>
    %18 = arith.addf %13, %17 : vector<72x128xf32>
    %19 = vector.extract_strided_slice %4 {offsets = [3, 0], sizes = [72, 4], strides = [1, 1]} : vector<80x4xf32> to vector<72x4xf32>
    %c3 = arith.constant 3 : index
    %c0_14 = arith.constant 0 : index
    %c0_15 = arith.constant 0 : index
    %20 = vector.load %arg4[%c3, %c0_14, %c0_15] : memref<5x4x128xf32, #tpu.memory_space<vmem>>, vector<1x4x128xf32>
    %21 = vector.shape_cast %20 : vector<1x4x128xf32> to vector<4x128xf32>
    %cst_16 = arith.constant dense<0.000000e+00> : vector<72x128xf32>
    %22 = tpu.matmul %19, %21, %cst_16 {dimension_numbers = #tpu.dot_dimension_numbers<[1], [0], [0], [1], [0, 0, 1, 1], [], []>} : vector<72x4xf32>, vector<4x128xf32>, vector<72x128xf32> -> vector<72x128xf32>
    %23 = arith.addf %18, %22 : vector<72x128xf32>
    %24 = vector.extract_strided_slice %4 {offsets = [4, 0], sizes = [72, 4], strides = [1, 1]} : vector<80x4xf32> to vector<72x4xf32>
    %c4 = arith.constant 4 : index
    %c0_17 = arith.constant 0 : index
    %c0_18 = arith.constant 0 : index
    %25 = vector.load %arg4[%c4, %c0_17, %c0_18] : memref<5x4x128xf32, #tpu.memory_space<vmem>>, vector<1x4x128xf32>
    %26 = vector.shape_cast %25 : vector<1x4x128xf32> to vector<4x128xf32>
    %cst_19 = arith.constant dense<0.000000e+00> : vector<72x128xf32>
    %27 = tpu.matmul %24, %26, %cst_19 {dimension_numbers = #tpu.dot_dimension_numbers<[1], [0], [0], [1], [0, 0, 1, 1], [], []>} : vector<72x4xf32>, vector<4x128xf32>, vector<72x128xf32> -> vector<72x128xf32>
    %28 = arith.addf %23, %27 : vector<72x128xf32>
    %c0_20 = arith.constant 0 : index
    %c0_21 = arith.constant 0 : index
    %29 = vector.load %arg5[%c0_20, %c0_21] : memref<1x128xf32, #tpu.memory_space<vmem>>, vector<1x128xf32>
    %30 = vector.broadcast %29 : vector<1x128xf32> to vector<72x128xf32>
    %31 = arith.mulf %28, %30 : vector<72x128xf32>
    %c0_22 = arith.constant 0 : index
    %c0_23 = arith.constant 0 : index
    %32 = vector.load %arg6[%c0_22, %c0_23] : memref<1x128xf32, #tpu.memory_space<vmem>>, vector<1x128xf32>
    %33 = vector.broadcast %32 : vector<1x128xf32> to vector<72x128xf32>
    %34 = arith.addf %31, %33 : vector<72x128xf32>
    %cst_24 = arith.constant 0.000000e+00 : f32
    %35 = vector.broadcast %cst_24 : f32 to vector<72x128xf32>
    %36 = arith.cmpf ogt, %34, %35 : vector<72x128xf32>
    %cst_25 = arith.constant 0.000000e+00 : f32
    %37 = vector.broadcast %cst_25 : f32 to vector<72x128xf32>
    %38 = arith.minimumf %34, %37 : vector<72x128xf32>
    %39 = math.exp %38 : vector<72x128xf32>
    %cst_26 = arith.constant 1.000000e+00 : f32
    %40 = vector.broadcast %cst_26 : f32 to vector<72x128xf32>
    %41 = arith.subf %39, %40 : vector<72x128xf32>
    %42 = arith.select %36, %34, %41 : vector<72x128xi1>, vector<72x128xf32>
    %c0_27 = arith.constant 0 : index
    %c0_28 = arith.constant 0 : index
    %43 = vector.load %arg8[%c0_27, %c0_28] : memref<72x128xf32, #tpu.memory_space<vmem>>, vector<72x128xf32>
    tpu.vector_store %arg8[%c0_27, %c0_28], %42 {strides = array<i32>} : memref<72x128xf32, #tpu.memory_space<vmem>>, vector<72x128xf32>,
    %c0_29 = arith.constant 0 : index
    %c0_30 = arith.constant 0 : index
    %44 = tpu.strided_load %arg8[%c0_29, %c0_30] {strides = array<i32: 3, 1>} : memref<72x128xf32, #tpu.memory_space<vmem>>, vector<24x128xf32>
    %c1_31 = arith.constant 1 : index
    %c0_32 = arith.constant 0 : index
    %45 = tpu.strided_load %arg8[%c1_31, %c0_32] {strides = array<i32: 3, 1>} : memref<72x128xf32, #tpu.memory_space<vmem>>, vector<24x128xf32>
    %46 = arith.maximumf %44, %45 : vector<24x128xf32>
    %c2_33 = arith.constant 2 : index
    %c0_34 = arith.constant 0 : index
    %47 = tpu.strided_load %arg8[%c2_33, %c0_34] {strides = array<i32: 3, 1>} : memref<72x128xf32, #tpu.memory_space<vmem>>, vector<24x128xf32>
    %48 = arith.maximumf %46, %47 : vector<24x128xf32>
    %c0_35 = arith.constant 0 : index
    %c0_36 = arith.constant 0 : index
    %c0_37 = arith.constant 0 : index
    %49 = vector.load %arg7[%c0_35, %c0_36, %c0_37] : memref<1x24x128xf32, #tpu.memory_space<vmem>>, vector<1x24x128xf32>
    %50 = vector.shape_cast %49 : vector<1x24x128xf32> to vector<24x128xf32>
    %51 = vector.shape_cast %48 : vector<24x128xf32> to vector<1x24x128xf32>
    tpu.vector_store %arg7[%c0_35, %c0_36, %c0_37], %51 {strides = array<i32>} : memref<1x24x128xf32, #tpu.memory_space<vmem>>, vector<1x24x128xf32>,
    return
  }
  func.func @transform_0(%arg0: i32, %arg1: i32) -> (i32, i32, i32) {
    %c0_i32 = arith.constant 0 : i32
    %c0_i32_0 = arith.constant 0 : i32
    return %arg0, %arg1, %c0_i32 : i32, i32, i32
  }
  func.func @transform_1(%arg0: i32, %arg1: i32) -> (i32, i32, i32) {
    %c1_i32 = arith.constant 1 : i32
    %0 = arith.addi %arg1, %c1_i32 : i32
    %c9_i32 = arith.constant 9 : i32
    %1 = arith.muli %0, %c9_i32 : i32
    %c0_i32 = arith.constant 0 : i32
    %c0_i32_0 = arith.constant 0 : i32
    return %arg0, %1, %c0_i32 : i32, i32, i32
  }
  func.func @transform_2(%arg0: i32, %arg1: i32) -> (i32, i32, i32) {
    %c0_i32 = arith.constant 0 : i32
    %c0_i32_0 = arith.constant 0 : i32
    %c0_i32_1 = arith.constant 0 : i32
    %c0_i32_2 = arith.constant 0 : i32
    return %c0_i32, %c0_i32_0, %c0_i32_1 : i32, i32, i32
  }
  func.func @transform_3(%arg0: i32, %arg1: i32) -> (i32, i32) {
    %c0_i32 = arith.constant 0 : i32
    %c0_i32_0 = arith.constant 0 : i32
    %c0_i32_1 = arith.constant 0 : i32
    return %c0_i32, %c0_i32_0 : i32, i32
  }
  func.func @transform_4(%arg0: i32, %arg1: i32) -> (i32, i32) {
    %c0_i32 = arith.constant 0 : i32
    %c0_i32_0 = arith.constant 0 : i32
    %c0_i32_1 = arith.constant 0 : i32
    return %c0_i32, %c0_i32_0 : i32, i32
  }
  func.func @transform_5(%arg0: i32, %arg1: i32) -> (i32, i32, i32) {
    %c0_i32 = arith.constant 0 : i32
    %c0_i32_0 = arith.constant 0 : i32
    return %arg0, %arg1, %c0_i32 : i32, i32, i32
  }
}

</mosaic_0001>

<llo_original>
// kernel: tpu_custom_call.1
$region0: #{tpu_custom_call.1}
  #allocation0 [shape = 'u32[]', space=smem, size = 0x4, offset = 0x4, fixed_abs, tag = 'smem constant byte address 0x4 - core index']
  #allocation1 [shape = 'u32[144,128]{1,0:T(1,128)}', space=vmem, size = 0x12000, scoped, tag = 'internal scratch']
  #allocation2 [shape = 'f32[72,128]{1,0:T(8,128)}', space=vmem, size = 0x9000, scoped, tag = 'scratch operand']
  %s0 = inlined_call_operand.vmem [shape: f32[2,80,4], index: 0, kind: input, shape index: {}]
  %s1 = inlined_call_operand.vmem [shape: f32[2,80,4], index: 1, kind: input, shape index: {}]
  %s2 = inlined_call_operand.vmem [shape: f32[5,4,128], index: 2, kind: input, shape index: {}]
  %s3 = inlined_call_operand.vmem [shape: f32[1,128], index: 3, kind: input, shape index: {}]
  %s4 = inlined_call_operand.vmem [shape: f32[1,128], index: 4, kind: input, shape index: {}]
  %s5 = inlined_call_operand.hbm [shape: f32[2,24,128], index: 5, kind: output, shape index: {}]
  %s6 = sld [smem:[#allocation0]]
  $region53: #{tpu_custom_call.1} parent=0
    _
  %s8 = ssub.s32 1, %s6
  %s9 = scalar_select 0, %s8, %s6
  $region1: #{tpu_custom_call.1} parent=0
    #allocation3 [shape = 'u8[24576]{0}', space=vmem, size = 0x6000, scoped, tag = 'output window, operand 0']
    #allocation4 [shape = 's32[2]{0}', space=sflag, size = 0x8, scoped, tag = 'scoped memory for tpu_custom_call.1']
    %10 = vsyncpa [#allocation4], 0
    %s11 = scalar_lea.sflag [#allocation4], 1
    %12 = vsyncpa %s11, 0
    loop: start=0, step=1, limit=4
    $region2: #{tpu_custom_call.1} parent=1 // loop_pre_header
      _
    $region3: #{tpu_custom_call.1} parent=1 // loop_header
      %s14 = sphi 0, %s18
      %p15 = scmp.ge.s32.totalorder %s14, 4
      %s21 = sphi 0, %s33
      %s22 = sphi 0, %s29
      %s23 = sphi 0, %s21
      %s24 = sphi 0, %s22
      %s25 = sphi 0, %s23
      %s26 = sphi 0, %s24
      %s38 = sphi 0, %s40
      %s41 = sphi 0, %s38
      %s42 = sphi 0, %s41
      %s58 = sphi 0, %s42
      %s70 = sphi 0, %s72
      %s73 = sphi 0, %s70
      %s74 = sphi 0, %s73
      %s90 = sphi 0, %s74
      %s94 = sphi 0, %s94
      %s96 = sphi 0, %s94
      %s97 = sphi 0, %s96
      %s111 = sphi 0, %s97
      %s115 = sphi 0, %s115
      %s117 = sphi 0, %s115
      %s118 = sphi 0, %s117
      %s132 = sphi 0, %s118
      %s136 = sphi 0, %s136
      %s138 = sphi 0, %s136
      %s139 = sphi 0, %s138
      %s153 = sphi 0, %s139
      %s161 = sphi 0, %s163
      %s164 = sphi 0, %s161
      %s165 = sphi 0, %s164
      %s181 = sphi 0, %s165
    $region4: #{tpu_custom_call.1} parent=1 // loop_header_branch
      %17 = sbr.rel (%p15) target = $region8
    $region5: #{tpu_custom_call.1} parent=1 // loop_body
      %s19 = ssub.s32 %s14, 1
      %s20 = ssub.s32 %s14, 2
      %s27 = sadd.s32 1, %s22
      %p28 = scmp.ge.s32.totalorder %s27, 1
      %s29 = scalar_select %p28, 0, %s27
      %s30 = sadd.s32 1, %s21
      %s31 = scalar_select %p28, %s30, %s21
      %p32 = scmp.ge.s32.totalorder %s31, 2
      %s33 = scalar_select %p32, 0, %s31
      %s34 = ssub.s32 %s21, %s33
      %s35 = ssub.s32 %s22, %s29
      %s36 = sor.u32 %s34, %s35
      %p37 = scmp.eq.s32.totalorder %s36, 0
      %s39 = sadd.s32 %s38, 1
      %s40 = scalar_select %p37, %s38, %s39
      %p43 = pneg %p37
      %p44 = scmp.eq.s32.totalorder %s14, 1
      %p45 = por %p43, %p44
      %p46 = scmp.ne.s32.totalorder %s38, %s41
      %p47 = scmp.eq.s32.totalorder %s14, 0
      %p48 = por %p46, %p47
      %p49 = scmp.ne.s32.totalorder %s38, %s41
      %p50 = scmp.eq.s32.totalorder %s19, 1
      %p51 = por %p49, %p50
      %p52 = scmp.ne.s32.totalorder %s41, %s42
      %p53 = scmp.eq.s32.totalorder %s19, 0
      %p54 = por %p52, %p53
      %p55 = scmp.ne.s32.totalorder %s41, %s42
      %p56 = scmp.eq.s32.totalorder %s20, 1
      %p57 = por %p55, %p56
      %p59 = scmp.ne.s32.totalorder %s42, %s58
      %p60 = scmp.eq.s32.totalorder %s20, 0
      %p61 = por %p59, %p60
      %s62 = sadd.s32 %s22, 1
      %s63 = smul.u32 %s62, 9
      %s64 = sadd.s32 %s29, 1
      %s65 = smul.u32 %s64, 9
      %s66 = ssub.s32 %s21, %s33
      %s67 = ssub.s32 %s63, %s65
      %s68 = sor.u32 %s66, %s67
      %p69 = scmp.eq.s32.totalorder %s68, 0
      %s71 = sadd.s32 %s70, 1
      %s72 = scalar_select %p69, %s70, %s71
      %p75 = pneg %p69
      %p76 = scmp.eq.s32.totalorder %s14, 1
      %p77 = por %p75, %p76
      %p78 = scmp.ne.s32.totalorder %s70, %s73
      %p79 = scmp.eq.s32.totalorder %s14, 0
      %p80 = por %p78, %p79
      %p81 = scmp.ne.s32.totalorder %s70, %s73
      %p82 = scmp.eq.s32.totalorder %s19, 1
      %p83 = por %p81, %p82
      %p84 = scmp.ne.s32.totalorder %s73, %s74
      %p85 = scmp.eq.s32.totalorder %s19, 0
      %p86 = por %p84, %p85
      %p87 = scmp.ne.s32.totalorder %s73, %s74
      %p88 = scmp.eq.s32.totalorder %s20, 1
      %p89 = por %p87, %p88
      %p91 = scmp.ne.s32.totalorder %s74, %s90
      %p92 = scmp.eq.s32.totalorder %s20, 0
      %p93 = por %p91, %p92
      %s95 = sadd.s32 %s94, 1
      %p98 = scmp.eq.s32.totalorder %s14, 1
      %p99 = scmp.ne.s32.totalorder %s94, %s96
      %p100 = scmp.eq.s32.totalorder %s14, 0
      %p101 = por %p99, %p100
      %p102 = scmp.ne.s32.totalorder %s94, %s96
      %p103 = scmp.eq.s32.totalorder %s19, 1
      %p104 = por %p102, %p103
      %p105 = scmp.ne.s32.totalorder %s96, %s97
      %p106 = scmp.eq.s32.totalorder %s19, 0
      %p107 = por %p105, %p106
      %p108 = scmp.ne.s32.totalorder %s96, %s97
      %p109 = scmp.eq.s32.totalorder %s20, 1
      %p110 = por %p108, %p109
      %p112 = scmp.ne.s32.totalorder %s97, %s111
      %p113 = scmp.eq.s32.totalorder %s20, 0
      %p114 = por %p112, %p113
      %s116 = sadd.s32 %s115, 1
      %p119 = scmp.eq.s32.totalorder %s14, 1
      %p120 = scmp.ne.s32.totalorder %s115, %s117
      %p121 = scmp.eq.s32.totalorder %s14, 0
      %p122 = por %p120, %p121
      %p123 = scmp.ne.s32.totalorder %s115, %s117
      %p124 = scmp.eq.s32.totalorder %s19, 1
      %p125 = por %p123, %p124
      %p126 = scmp.ne.s32.totalorder %s117, %s118
      %p127 = scmp.eq.s32.totalorder %s19, 0
      %p128 = por %p126, %p127
      %p129 = scmp.ne.s32.totalorder %s117, %s118
      %p130 = scmp.eq.s32.totalorder %s20, 1
      %p131 = por %p129, %p130
      %p133 = scmp.ne.s32.totalorder %s118, %s132
      %p134 = scmp.eq.s32.totalorder %s20, 0
      %p135 = por %p133, %p134
      %s137 = sadd.s32 %s136, 1
      %p140 = scmp.eq.s32.totalorder %s14, 1
      %p141 = scmp.ne.s32.totalorder %s136, %s138
      %p142 = scmp.eq.s32.totalorder %s14, 0
      %p143 = por %p141, %p142
      %p144 = scmp.ne.s32.totalorder %s136, %s138
      %p145 = scmp.eq.s32.totalorder %s19, 1
      %p146 = por %p144, %p145
      %p147 = scmp.ne.s32.totalorder %s138, %s139
      %p148 = scmp.eq.s32.totalorder %s19, 0
      %p149 = por %p147, %p148
      %p150 = scmp.ne.s32.totalorder %s138, %s139
      %p151 = scmp.eq.s32.totalorder %s20, 1
      %p152 = por %p150, %p151
      %p154 = scmp.ne.s32.totalorder %s139, %s153
      %p155 = scmp.eq.s32.totalorder %s20, 0
      %p156 = por %p154, %p155
      %s157 = ssub.s32 %s21, %s33
      %s158 = ssub.s32 %s22, %s29
      %s159 = sor.u32 %s157, %s158
      %p160 = scmp.eq.s32.totalorder %s159, 0
      %s162 = sadd.s32 %s161, 1
      %s163 = scalar_select %p160, %s161, %s162
      %p166 = pneg %p160
      %p167 = scmp.eq.s32.totalorder %s14, 1
      %p168 = por %p166, %p167
      %p169 = scmp.ne.s32.totalorder %s161, %s164
      %p170 = scmp.eq.s32.totalorder %s14, 0
      %p171 = por %p169, %p170
      %p172 = scmp.ne.s32.totalorder %s161, %s164
      %p173 = scmp.eq.s32.totalorder %s19, 1
      %p174 = por %p172, %p173
      %p175 = scmp.ne.s32.totalorder %s164, %s165
      %p176 = scmp.eq.s32.totalorder %s19, 0
      %p177 = por %p175, %p176
      %p178 = scmp.ne.s32.totalorder %s164, %s165
      %p179 = scmp.eq.s32.totalorder %s20, 1
      %p180 = por %p178, %p179
      %p182 = scmp.ne.s32.totalorder %s165, %s181
      %p183 = scmp.eq.s32.totalorder %s20, 0
      %p184 = por %p182, %p183
      %p185 = scmp.le.s32.totalorder 1, %s14
      %p186 = scmp.lt.s32.totalorder %s14, 3
      %p187 = pnand %p185, %p186
      %p188 = pneg %p187
      // Predicated region
      $region9: #{tpu_custom_call.1} parent=5 // pred_check
        _
      $region10: #{tpu_custom_call.1} parent=5 // pred_check_branch
        %190 = sbr.rel (%p187) target = $region12
      $region11: #{tpu_custom_call.1} parent=5 // pred_region
        %s191 = ssub.s32 %s14, 1
        // Predicated region
        $region13: #{tpu_custom_call.1} parent=11 // pred_check
          %p192 = pneg %p107
        $region14: #{tpu_custom_call.1} parent=11 // pred_check_branch
          %194 = sbr.rel (%p192) target = $region16
        $region15: #{tpu_custom_call.1} parent=11 // pred_region
          _
        $region16: #{tpu_custom_call.1} parent=11 // pred_fallthru
          _
        // Predicated region
        $region17: #{tpu_custom_call.1} parent=11 // pred_check
          %p195 = pneg %p128
        $region18: #{tpu_custom_call.1} parent=11 // pred_check_branch
          %197 = sbr.rel (%p195) target = $region20
        $region19: #{tpu_custom_call.1} parent=11 // pred_region
          _
        $region20: #{tpu_custom_call.1} parent=11 // pred_fallthru
          _
        // Predicated region
        $region21: #{tpu_custom_call.1} parent=11 // pred_check
          %p198 = pneg %p149
        $region22: #{tpu_custom_call.1} parent=11 // pred_check_branch
          %200 = sbr.rel (%p198) target = $region24
        $region23: #{tpu_custom_call.1} parent=11 // pred_region
          _
        $region24: #{tpu_custom_call.1} parent=11 // pred_fallthru
          _
      $region12: #{tpu_custom_call.1} parent=5 // pred_fallthru
        _
      %p201 = scmp.lt.s32.totalorder %s14, 2
      // Predicated region
      $region25: #{tpu_custom_call.1} parent=5 // pred_check
        %p202 = pneg %p201
      $region26: #{tpu_custom_call.1} parent=5 // pred_check_branch
        %204 = sbr.rel (%p202) target = $region28
      $region27: #{tpu_custom_call.1} parent=5 // pred_region
        // Predicated region
        $region29: #{tpu_custom_call.1} parent=27 // pred_check
          %p205 = pneg %p48
        $region30: #{tpu_custom_call.1} parent=27 // pred_check_branch
          %207 = sbr.rel (%p205) target = $region32
        $region31: #{tpu_custom_call.1} parent=27 // pred_region
          %s208 = smul.u32 9, %s22
          %s209 = ssub.s32 10, %s208
          %p210 = scmp.lt.s32.totalorder %s209, 9
          %s211 = scalar_select %p210, %s209, 9
          %s212 = smul.u32 128, %s211
          %p213 = scmp.lt.s32.totalorder %s21, 1
          %s214 = scalar_select %p213, %s21, 1
          %p215 = scmp.lt.s32.totalorder %s208, 9
          %s216 = scalar_select %p215, %s208, 9
          %s217 = smul.addr %s214, 10
          %s218 = sadd.s32 %s216, %s217
          %s219 = smul.addr %s218, 8
          %s220 = scalar_lea.vmem %s0, %s219
          %s221 = smul.u32 9, %s22
          %s222 = ssub.s32 10, %s221
          %p223 = scmp.lt.s32.totalorder %s222, 9
          %s224 = scalar_select %p223, %s222, 9
          %s225 = smul.u32 128, %s224
        $region32: #{tpu_custom_call.1} parent=27 // pred_fallthru
          _
        // Predicated region
        $region33: #{tpu_custom_call.1} parent=27 // pred_check
          %p226 = pneg %p80
        $region34: #{tpu_custom_call.1} parent=27 // pred_check_branch
          %228 = sbr.rel (%p226) target = $region36
        $region35: #{tpu_custom_call.1} parent=27 // pred_region
          %s229 = sadd.s32 %s22, 1
          %s230 = smul.u32 %s229, 9
          %p231 = scmp.lt.s32.totalorder %s21, 1
          %s232 = scalar_select %p231, %s21, 1
          %p233 = scmp.lt.s32.totalorder %s230, 9
          %s234 = scalar_select %p233, %s230, 9
          %s235 = smul.addr %s232, 10
          %s236 = sadd.s32 %s234, %s235
          %s237 = smul.addr %s236, 8
          %s238 = scalar_lea.vmem %s1, %s237
          %s239 = sadd.s32 %s22, 1
          %s240 = smul.u32 %s239, 9
        $region36: #{tpu_custom_call.1} parent=27 // pred_fallthru
          _
      $region28: #{tpu_custom_call.1} parent=5 // pred_fallthru
        _
      %p241 = scmp.le.s32.totalorder 1, %s14
      %p242 = scmp.lt.s32.totalorder %s14, 3
      %p243 = pnand %p241, %p242
      %p244 = pneg %p243
      // Predicated region
      $region37: #{tpu_custom_call.1} parent=5 // pred_check
        _
      $region38: #{tpu_custom_call.1} parent=5 // pred_check_branch
        %246 = sbr.rel (%p243) target = $region40
      $region39: #{tpu_custom_call.1} parent=5 // pred_region
        %s247 = ssub.s32 %s14, 1
        %s248 = smul.u32 9, %s24
        %s249 = ssub.s32 10, %s248
        %p250 = scmp.lt.s32.totalorder %s249, 9
        %s251 = scalar_select %p250, %s249, 9
        %s252 = smul.u32 128, %s251
        %p253 = scmp.lt.s32.totalorder %s23, 1
        %s254 = scalar_select %p253, %s23, 1
        %p255 = scmp.lt.s32.totalorder %s248, 9
        %s256 = scalar_select %p255, %s248, 9
        %s257 = smul.addr %s254, 10
        %s258 = sadd.s32 %s256, %s257
        %s259 = smul.addr %s258, 8
        %s260 = scalar_lea.vmem %s0, %s259
        %p261 = pneg %p54
        %p262 = pneg %p51
        %s263 = sadd.s32 %s24, 1
        %s264 = smul.u32 %s263, 9
        %p265 = scmp.lt.s32.totalorder %s23, 1
        %s266 = scalar_select %p265, %s23, 1
        %p267 = scmp.lt.s32.totalorder %s264, 9
        %s268 = scalar_select %p267, %s264, 9
        %s269 = smul.addr %s266, 10
        %s270 = sadd.s32 %s268, %s269
        %s271 = smul.addr %s270, 8
        %s272 = scalar_lea.vmem %s1, %s271
        %p273 = pneg %p86
        %p274 = pneg %p83
        %p275 = pneg %p107
        %p276 = pneg %p104
        %p277 = pneg %p128
        %p278 = pneg %p125
        %p279 = pneg %p149
        %p280 = pneg %p146
        %p281 = pneg %p177
        %p282 = pneg %p174
        %s283 = sand.u32 %s164, 1
        %s284 = scalar_lea.sflag [#allocation4], %s283
        %s285 = sand.u32 %s164, 1
        %s286 = smul.addr %s285, 24
        %s287 = scalar_lea.vmem [#allocation3], %s286
        %s288 = smul.u32 9, %s24
        %s289 = ssub.s32 10, %s288
        %p290 = scmp.lt.s32.totalorder %s289, 9
        %s291 = scalar_select %p290, %s289, 9
        %s292 = smul.u32 128, %s291
        %p293 = scmp.lt.s32.totalorder %s23, 1
        %s294 = scalar_select %p293, %s23, 1
        %p295 = scmp.lt.s32.totalorder %s288, 9
        %s296 = scalar_select %p295, %s288, 9
        %s297 = smul.addr %s294, 10
        %s298 = sadd.s32 %s296, %s297
        %s299 = smul.addr %s298, 8
        %s300 = scalar_lea.vmem %s0, %s299
        %s301 = smul.u32 9, %s24
        %s302 = ssub.s32 10, %s301
        %p303 = scmp.lt.s32.totalorder %s302, 9
        %s304 = scalar_select %p303, %s302, 9
        %s305 = smul.u32 128, %s304
        %s306 = sadd.s32 %s24, 1
        %s307 = smul.u32 %s306, 9
        %p308 = scmp.lt.s32.totalorder %s23, 1
        %s309 = scalar_select %p308, %s23, 1
        %p310 = scmp.lt.s32.totalorder %s307, 9
        %s311 = scalar_select %p310, %s307, 9
        %s312 = smul.addr %s309, 10
        %s313 = sadd.s32 %s311, %s312
        %s314 = smul.addr %s313, 8
        %s315 = scalar_lea.vmem %s1, %s314
        %s316 = sadd.s32 %s24, 1
        %s317 = smul.u32 %s316, 9
        %s318 = smul.u32 3, %s24
        %v319 = vld [vmem:[%s300] sm:$0xff]
        %v320 = vld [vmem:[%s300 + $0x8] sm:$0xff]
        %v321 = vld [vmem:[%s300 + $0x10] sm:$0xff]
        %v322 = vld [vmem:[%s300 + $0x18] sm:$0xff]
        %v323 = vld [vmem:[%s300 + $0x20] sm:$0xff]
        %v324 = vld [vmem:[%s300 + $0x28] sm:$0xff]
        %v325 = vld [vmem:[%s300 + $0x30] sm:$0xff]
        %v326 = vld [vmem:[%s300 + $0x38] sm:$0xff]
        %v327 = vld [vmem:[%s300 + $0x40] sm:$0xff]
        %v328 = vld [vmem:[%s315] sm:$0xff]
        %v329 = vld [vmem:[%s2] sm:$0xf]
        %s330 = scalar_lea.vmem %s2, 4
        %v331 = vld [vmem:[%s330] sm:$0xf]
        %vm342 = vcmask 1046528
        %v343 = vrot.slane %v319, 1
        %v344 = vrot.slane %v320, 1
        %v345 = vsel %vm342, %v343, %v344
        %v346 = vrot.slane %v321, 1
        %v347 = vsel %vm342, %v344, %v346
        %v348 = vrot.slane %v322, 1
        %v349 = vsel %vm342, %v346, %v348
        %v350 = vrot.slane %v323, 1
        %v351 = vsel %vm342, %v348, %v350
        %v352 = vrot.slane %v324, 1
        %v353 = vsel %vm342, %v350, %v352
        %v354 = vrot.slane %v325, 1
        %v355 = vsel %vm342, %v352, %v354
        %v356 = vrot.slane %v326, 1
        %v357 = vsel %vm342, %v354, %v356
        %v358 = vrot.slane %v327, 1
        %v359 = vsel %vm342, %v356, %v358
        %v360 = vrot.slane %v328, 1
        %v361 = vsel %vm342, %v358, %v360
        %vm362 = vcmask 31744
        %v363 = vsel %vm362, %v345, 0
        %v365 = vsel %vm362, %v347, 0
        %v367 = vsel %vm362, %v349, 0
        %v369 = vsel %vm362, %v351, 0
        %v371 = vsel %vm362, %v353, 0
        %v373 = vsel %vm362, %v355, 0
        %v375 = vsel %vm362, %v357, 0
        %v377 = vsel %vm362, %v359, 0
        %v379 = vsel %vm362, %v361, 0
        %vm381 = vcmask 1043456
        %v383 = vsel %vm381, %v331, 0
        %385 = vmatprep.subr.mxu0 0.0
        %386 = vmatpush1.msra.mxu0 %v383
        %387 = vmatprep.subr.mxu0 0.0
        %388 = vmatpush1.msra.mxu0 0.0
        %389 = vmatprep.subr.mxu0 0.0
        %390 = vmatpush1.msra.mxu0 0.0
        %391 = vmatprep.subr.mxu0 0.0
        %392 = vmatpush1.msra.mxu0 0.0
        %393 = vmatprep.subr.mxu0 0.0
        %394 = vmatpush1.msra.mxu0 0.0
        %395 = vmatprep.subr.mxu0 0.0
        %396 = vmatpush1.msra.mxu0 0.0
        %397 = vmatprep.subr.mxu0 0.0
        %398 = vmatpush1.msra.mxu0 0.0
        %399 = vmatprep.subr.mxu0 0.0
        %400 = vmatpush1.msra.mxu0 0.0
        %401 = vmatprep.subr.mxu0 0.0
        %402 = vmatpush1.msra.mxu0 0.0
        %403 = vmatprep.subr.mxu0 0.0
        %404 = vmatpush1.msra.mxu0 0.0
        %405 = vmatprep.subr.mxu0 0.0
        %406 = vmatpush1.msra.mxu0 0.0
        %407 = vmatprep.subr.mxu0 0.0
        %408 = vmatpush1.msra.mxu0 0.0
        %409 = vmatprep.subr.mxu0 0.0
        %410 = vmatpush1.msra.mxu0 0.0
        %411 = vmatprep.subr.mxu0 0.0
        %412 = vmatpush1.msra.mxu0 0.0
        %413 = vmatprep.subr.mxu0 0.0
        %414 = vmatpush1.msra.mxu0 0.0
        %415 = vmatprep.subr.mxu0 0.0
        %416 = vmatpush1.msra.mxu0 0.0
        %417 = vmatprep.subr.mxu0 0.0
        %418 = vmatpush1.msra.mxu0 0.0
        %419 = vmatprep.subr.mxu0 0.0
        %420 = vmatpush1.msra.mxu0 0.0
        %421 = vmatprep.subr.mxu0 0.0
        %422 = vmatpush1.msra.mxu0 0.0
        %423 = vmatprep.subr.mxu0 0.0
        %424 = vmatpush1.msra.mxu0 0.0
        %425 = vmatprep.subr.mxu0 0.0
        %426 = vmatpush1.msra.mxu0 0.0
        %427 = vmatprep.subr.mxu0 0.0
        %428 = vmatpush1.msra.mxu0 0.0
        %429 = vmatprep.subr.mxu0 0.0
        %430 = vmatpush1.msra.mxu0 0.0
        %431 = vmatprep.subr.mxu0 0.0
        %432 = vmatpush1.msra.mxu0 0.0
        %433 = vmatprep.subr.mxu0 0.0
        %434 = vmatpush1.msra.mxu0 0.0
        %435 = vmatprep.subr.mxu0 0.0
        %436 = vmatpush1.msra.mxu0 0.0
        %437 = vmatprep.subr.mxu0 0.0
        %438 = vmatpush1.msra.mxu0 0.0
        %439 = vmatprep.subr.mxu0 0.0
        %440 = vmatpush1.msra.mxu0 0.0
        %441 = vmatprep.subr.mxu0 0.0
        %442 = vmatpush1.msra.mxu0 0.0
        %443 = vmatprep.subr.mxu0 0.0
        %444 = vmatpush1.msra.mxu0 0.0
        %445 = vmatprep.subr.mxu0 0.0
        %446 = vmatpush1.msra.mxu0 0.0
        %447 = vmatprep.subr.mxu0 0.0
        %448 = vmatpush1.msra.mxu0 0.0
        %449 = vmatprep.mubr.f32.mxu0 0.0
        %450 = vmatmul.mubr.f32.gmra.mrb[0].mxu0 %v363
        %v451 = vpop.f32.mrb[0].mxu0
        %v452 = vadd.f32 0.0, %v451
        %v453 = vpop.f32.mrb[0].mxu0
        %454 = vmatprep.mubr.f32.mxu0 0.0
        %455 = vmatmul.mubr.f32.gmra.mrb[0].mxu0 %v365
        %v456 = vpop.f32.mrb[0].mxu0
        %v457 = vadd.f32 0.0, %v456
        %v458 = vpop.f32.mrb[0].mxu0
        %459 = vmatprep.mubr.f32.mxu0 0.0
        %460 = vmatmul.mubr.f32.gmra.mrb[0].mxu0 %v367
        %v461 = vpop.f32.mrb[0].mxu0
        %v462 = vadd.f32 0.0, %v461
        %v463 = vpop.f32.mrb[0].mxu0
        %464 = vmatprep.mubr.f32.mxu0 0.0
        %465 = vmatmul.mubr.f32.gmra.mrb[0].mxu0 %v369
        %v466 = vpop.f32.mrb[0].mxu0
        %v467 = vadd.f32 0.0, %v466
        %v468 = vpop.f32.mrb[0].mxu0
        %469 = vmatprep.mubr.f32.mxu0 0.0
        %470 = vmatmul.mubr.f32.gmra.mrb[0].mxu0 %v371
        %v471 = vpop.f32.mrb[0].mxu0
        %v472 = vadd.f32 0.0, %v471
        %v473 = vpop.f32.mrb[0].mxu0
        %474 = vmatprep.mubr.f32.mxu0 0.0
        %475 = vmatmul.mubr.f32.gmra.mrb[0].mxu0 %v373
        %v476 = vpop.f32.mrb[0].mxu0
        %v477 = vadd.f32 0.0, %v476
        %v478 = vpop.f32.mrb[0].mxu0
        %479 = vmatprep.mubr.f32.mxu0 0.0
        %480 = vmatmul.mubr.f32.gmra.mrb[0].mxu0 %v375
        %v481 = vpop.f32.mrb[0].mxu0
        %v482 = vadd.f32 0.0, %v481
        %v483 = vpop.f32.mrb[0].mxu0
        %484 = vmatprep.mubr.f32.mxu0 0.0
        %485 = vmatmul.mubr.f32.gmra.mrb[0].mxu0 %v377
        %v486 = vpop.f32.mrb[0].mxu0
        %v487 = vadd.f32 0.0, %v486
        %v488 = vpop.f32.mrb[0].mxu0
        %489 = vmatprep.mubr.f32.mxu0 0.0
        %490 = vmatmul.mubr.f32.gmra.mrb[0].mxu0 %v379
        %v491 = vpop.f32.mrb[0].mxu0
        %v492 = vadd.f32 0.0, %v491
        %v493 = vpop.f32.mrb[0].mxu0
        %494 = vdwg.mxu0
        %v495 = vsel %vm362, %v319, 0
        %v497 = vsel %vm362, %v320, 0
        %v499 = vsel %vm362, %v321, 0
        %v501 = vsel %vm362, %v322, 0
        %v503 = vsel %vm362, %v323, 0
        %v505 = vsel %vm362, %v324, 0
        %v507 = vsel %vm362, %v325, 0
        %v509 = vsel %vm362, %v326, 0
        %v511 = vsel %vm362, %v327, 0
        %v514 = vsel %vm381, %v329, 0
        %516 = vmatprep.subr.mxu0 0.0
        %517 = vmatpush1.msra.mxu0 %v514
        %518 = vmatprep.subr.mxu0 0.0
        %519 = vmatpush1.msra.mxu0 0.0
        %520 = vmatprep.subr.mxu0 0.0
        %521 = vmatpush1.msra.mxu0 0.0
        %522 = vmatprep.subr.mxu0 0.0
        %523 = vmatpush1.msra.mxu0 0.0
        %524 = vmatprep.subr.mxu0 0.0
        %525 = vmatpush1.msra.mxu0 0.0
        %526 = vmatprep.subr.mxu0 0.0
        %527 = vmatpush1.msra.mxu0 0.0
        %528 = vmatprep.subr.mxu0 0.0
        %529 = vmatpush1.msra.mxu0 0.0
        %530 = vmatprep.subr.mxu0 0.0
        %531 = vmatpush1.msra.mxu0 0.0
        %532 = vmatprep.subr.mxu0 0.0
        %533 = vmatpush1.msra.mxu0 0.0
        %534 = vmatprep.subr.mxu0 0.0
        %535 = vmatpush1.msra.mxu0 0.0
        %536 = vmatprep.subr.mxu0 0.0
        %537 = vmatpush1.msra.mxu0 0.0
        %538 = vmatprep.subr.mxu0 0.0
        %539 = vmatpush1.msra.mxu0 0.0
        %540 = vmatprep.subr.mxu0 0.0
        %541 = vmatpush1.msra.mxu0 0.0
        %542 = vmatprep.subr.mxu0 0.0
        %543 = vmatpush1.msra.mxu0 0.0
        %544 = vmatprep.subr.mxu0 0.0
        %545 = vmatpush1.msra.mxu0 0.0
        %546 = vmatprep.subr.mxu0 0.0
        %547 = vmatpush1.msra.mxu0 0.0
        %548 = vmatprep.subr.mxu0 0.0
        %549 = vmatpush1.msra.mxu0 0.0
        %550 = vmatprep.subr.mxu0 0.0
        %551 = vmatpush1.msra.mxu0 0.0
        %552 = vmatprep.subr.mxu0 0.0
        %553 = vmatpush1.msra.mxu0 0.0
        %554 = vmatprep.subr.mxu0 0.0
        %555 = vmatpush1.msra.mxu0 0.0
        %556 = vmatprep.subr.mxu0 0.0
        %557 = vmatpush1.msra.mxu0 0.0
        %558 = vmatprep.subr.mxu0 0.0
        %559 = vmatpush1.msra.mxu0 0.0
        %560 = vmatprep.subr.mxu0 0.0
        %561 = vmatpush1.msra.mxu0 0.0
        %562 = vmatprep.subr.mxu0 0.0
        %563 = vmatpush1.msra.mxu0 0.0
        %564 = vmatprep.subr.mxu0 0.0
        %565 = vmatpush1.msra.mxu0 0.0
        %566 = vmatprep.subr.mxu0 0.0
        %567 = vmatpush1.msra.mxu0 0.0
        %568 = vmatprep.subr.mxu0 0.0
        %569 = vmatpush1.msra.mxu0 0.0
        %570 = vmatprep.subr.mxu0 0.0
        %571 = vmatpush1.msra.mxu0 0.0
        %572 = vmatprep.subr.mxu0 0.0
        %573 = vmatpush1.msra.mxu0 0.0
        %574 = vmatprep.subr.mxu0 0.0
        %575 = vmatpush1.msra.mxu0 0.0
        %576 = vmatprep.subr.mxu0 0.0
        %577 = vmatpush1.msra.mxu0 0.0
        %578 = vmatprep.subr.mxu0 0.0
        %579 = vmatpush1.msra.mxu0 0.0
        %580 = vmatprep.mubr.f32.mxu0 0.0
        %581 = vmatmul.mubr.f32.gmra.mrb[0].mxu0 %v495
        %v582 = vpop.f32.mrb[0].mxu0
        %v583 = vadd.f32 %v452, %v582
        %v584 = vpop.f32.mrb[0].mxu0
        %585 = vmatprep.mubr.f32.mxu0 0.0
        %586 = vmatmul.mubr.f32.gmra.mrb[0].mxu0 %v497
        %v587 = vpop.f32.mrb[0].mxu0
        %v588 = vadd.f32 %v457, %v587
        %v589 = vpop.f32.mrb[0].mxu0
        %590 = vmatprep.mubr.f32.mxu0 0.0
        %591 = vmatmul.mubr.f32.gmra.mrb[0].mxu0 %v499
        %v592 = vpop.f32.mrb[0].mxu0
        %v593 = vadd.f32 %v462, %v592
        %v594 = vpop.f32.mrb[0].mxu0
        %595 = vmatprep.mubr.f32.mxu0 0.0
        %596 = vmatmul.mubr.f32.gmra.mrb[0].mxu0 %v501
        %v597 = vpop.f32.mrb[0].mxu0
        %v598 = vadd.f32 %v467, %v597
        %v599 = vpop.f32.mrb[0].mxu0
        %600 = vmatprep.mubr.f32.mxu0 0.0
        %601 = vmatmul.mubr.f32.gmra.mrb[0].mxu0 %v503
        %v602 = vpop.f32.mrb[0].mxu0
        %v603 = vadd.f32 %v472, %v602
        %v604 = vpop.f32.mrb[0].mxu0
        %605 = vmatprep.mubr.f32.mxu0 0.0
        %606 = vmatmul.mubr.f32.gmra.mrb[0].mxu0 %v505
        %v607 = vpop.f32.mrb[0].mxu0
        %v608 = vadd.f32 %v477, %v607
        %v609 = vpop.f32.mrb[0].mxu0
        %610 = vmatprep.mubr.f32.mxu0 0.0
        %611 = vmatmul.mubr.f32.gmra.mrb[0].mxu0 %v507
        %v612 = vpop.f32.mrb[0].mxu0
        %v613 = vadd.f32 %v482, %v612
        %v614 = vpop.f32.mrb[0].mxu0
        %615 = vmatprep.mubr.f32.mxu0 0.0
        %616 = vmatmul.mubr.f32.gmra.mrb[0].mxu0 %v509
        %v617 = vpop.f32.mrb[0].mxu0
        %v618 = vadd.f32 %v487, %v617
        %v619 = vpop.f32.mrb[0].mxu0
        %620 = vmatprep.mubr.f32.mxu0 0.0
        %621 = vmatmul.mubr.f32.gmra.mrb[0].mxu0 %v511
        %v622 = vpop.f32.mrb[0].mxu0
        %v623 = vadd.f32 %v492, %v622
        %v624 = vpop.f32.mrb[0].mxu0
        %625 = vdwg.mxu0
        %s626 = scalar_lea.vmem %s2, 8
        %v627 = vld [vmem:[%s626] sm:$0xf]
        %vm628 = vcmask 1045504
        %v629 = vrot.slane %v319, 2
        %v630 = vrot.slane %v320, 2
        %v631 = vsel %vm628, %v629, %v630
        %v632 = vrot.slane %v321, 2
        %v633 = vsel %vm628, %v630, %v632
        %v634 = vrot.slane %v322, 2
        %v635 = vsel %vm628, %v632, %v634
        %v636 = vrot.slane %v323, 2
        %v637 = vsel %vm628, %v634, %v636
        %v638 = vrot.slane %v324, 2
        %v639 = vsel %vm628, %v636, %v638
        %v640 = vrot.slane %v325, 2
        %v641 = vsel %vm628, %v638, %v640
        %v642 = vrot.slane %v326, 2
        %v643 = vsel %vm628, %v640, %v642
        %v644 = vrot.slane %v327, 2
        %v645 = vsel %vm628, %v642, %v644
        %v646 = vrot.slane %v328, 2
        %v647 = vsel %vm628, %v644, %v646
        %v648 = vsel %vm362, %v631, 0
        %v650 = vsel %vm362, %v633, 0
        %v652 = vsel %vm362, %v635, 0
        %v654 = vsel %vm362, %v637, 0
        %v656 = vsel %vm362, %v639, 0
        %v658 = vsel %vm362, %v641, 0
        %v660 = vsel %vm362, %v643, 0
        %v662 = vsel %vm362, %v645, 0
        %v664 = vsel %vm362, %v647, 0
        %v667 = vsel %vm381, %v627, 0
        %669 = vmatprep.subr.mxu0 0.0
        %670 = vmatpush1.msra.mxu0 %v667
        %671 = vmatprep.subr.mxu0 0.0
        %672 = vmatpush1.msra.mxu0 0.0
        %673 = vmatprep.subr.mxu0 0.0
        %674 = vmatpush1.msra.mxu0 0.0
        %675 = vmatprep.subr.mxu0 0.0
        %676 = vmatpush1.msra.mxu0 0.0
        %677 = vmatprep.subr.mxu0 0.0
        %678 = vmatpush1.msra.mxu0 0.0
        %679 = vmatprep.subr.mxu0 0.0
        %680 = vmatpush1.msra.mxu0 0.0
        %681 = vmatprep.subr.mxu0 0.0
        %682 = vmatpush1.msra.mxu0 0.0
        %683 = vmatprep.subr.mxu0 0.0
        %684 = vmatpush1.msra.mxu0 0.0
        %685 = vmatprep.subr.mxu0 0.0
        %686 = vmatpush1.msra.mxu0 0.0
        %687 = vmatprep.subr.mxu0 0.0
        %688 = vmatpush1.msra.mxu0 0.0
        %689 = vmatprep.subr.mxu0 0.0
        %690 = vmatpush1.msra.mxu0 0.0
        %691 = vmatprep.subr.mxu0 0.0
        %692 = vmatpush1.msra.mxu0 0.0
        %693 = vmatprep.subr.mxu0 0.0
        %694 = vmatpush1.msra.mxu0 0.0
        %695 = vmatprep.subr.mxu0 0.0
        %696 = vmatpush1.msra.mxu0 0.0
        %697 = vmatprep.subr.mxu0 0.0
        %698 = vmatpush1.msra.mxu0 0.0
        %699 = vmatprep.subr.mxu0 0.0
        %700 = vmatpush1.msra.mxu0 0.0
        %701 = vmatprep.subr.mxu0 0.0
        %702 = vmatpush1.msra.mxu0 0.0
        %703 = vmatprep.subr.mxu0 0.0
        %704 = vmatpush1.msra.mxu0 0.0
        %705 = vmatprep.subr.mxu0 0.0
        %706 = vmatpush1.msra.mxu0 0.0
        %707 = vmatprep.subr.mxu0 0.0
        %708 = vmatpush1.msra.mxu0 0.0
        %709 = vmatprep.subr.mxu0 0.0
        %710 = vmatpush1.msra.mxu0 0.0
        %711 = vmatprep.subr.mxu0 0.0
        %712 = vmatpush1.msra.mxu0 0.0
        %713 = vmatprep.subr.mxu0 0.0
        %714 = vmatpush1.msra.mxu0 0.0
        %715 = vmatprep.subr.mxu0 0.0
        %716 = vmatpush1.msra.mxu0 0.0
        %717 = vmatprep.subr.mxu0 0.0
        %718 = vmatpush1.msra.mxu0 0.0
        %719 = vmatprep.subr.mxu0 0.0
        %720 = vmatpush1.msra.mxu0 0.0
        %721 = vmatprep.subr.mxu0 0.0
        %722 = vmatpush1.msra.mxu0 0.0
        %723 = vmatprep.subr.mxu0 0.0
        %724 = vmatpush1.msra.mxu0 0.0
        %725 = vmatprep.subr.mxu0 0.0
        %726 = vmatpush1.msra.mxu0 0.0
        %727 = vmatprep.subr.mxu0 0.0
        %728 = vmatpush1.msra.mxu0 0.0
        %729 = vmatprep.subr.mxu0 0.0
        %730 = vmatpush1.msra.mxu0 0.0
        %731 = vmatprep.subr.mxu0 0.0
        %732 = vmatpush1.msra.mxu0 0.0
        %733 = vmatprep.mubr.f32.mxu0 0.0
        %734 = vmatmul.mubr.f32.gmra.mrb[0].mxu0 %v648
        %v735 = vpop.f32.mrb[0].mxu0
        %v736 = vadd.f32 0.0, %v735
        %v737 = vpop.f32.mrb[0].mxu0
        %738 = vmatprep.mubr.f32.mxu0 0.0
        %739 = vmatmul.mubr.f32.gmra.mrb[0].mxu0 %v650
        %v740 = vpop.f32.mrb[0].mxu0
        %v741 = vadd.f32 0.0, %v740
        %v742 = vpop.f32.mrb[0].mxu0
        %743 = vmatprep.mubr.f32.mxu0 0.0
        %744 = vmatmul.mubr.f32.gmra.mrb[0].mxu0 %v652
        %v745 = vpop.f32.mrb[0].mxu0
        %v746 = vadd.f32 0.0, %v745
        %v747 = vpop.f32.mrb[0].mxu0
        %748 = vmatprep.mubr.f32.mxu0 0.0
        %749 = vmatmul.mubr.f32.gmra.mrb[0].mxu0 %v654
        %v750 = vpop.f32.mrb[0].mxu0
        %v751 = vadd.f32 0.0, %v750
        %v752 = vpop.f32.mrb[0].mxu0
        %753 = vmatprep.mubr.f32.mxu0 0.0
        %754 = vmatmul.mubr.f32.gmra.mrb[0].mxu0 %v656
        %v755 = vpop.f32.mrb[0].mxu0
        %v756 = vadd.f32 0.0, %v755
        %v757 = vpop.f32.mrb[0].mxu0
        %758 = vmatprep.mubr.f32.mxu0 0.0
        %759 = vmatmul.mubr.f32.gmra.mrb[0].mxu0 %v658
        %v760 = vpop.f32.mrb[0].mxu0
        %v761 = vadd.f32 0.0, %v760
        %v762 = vpop.f32.mrb[0].mxu0
        %763 = vmatprep.mubr.f32.mxu0 0.0
        %764 = vmatmul.mubr.f32.gmra.mrb[0].mxu0 %v660
        %v765 = vpop.f32.mrb[0].mxu0
        %v766 = vadd.f32 0.0, %v765
        %v767 = vpop.f32.mrb[0].mxu0
        %768 = vmatprep.mubr.f32.mxu0 0.0
        %769 = vmatmul.mubr.f32.gmra.mrb[0].mxu0 %v662
        %v770 = vpop.f32.mrb[0].mxu0
        %v771 = vadd.f32 0.0, %v770
        %v772 = vpop.f32.mrb[0].mxu0
        %773 = vmatprep.mubr.f32.mxu0 0.0
        %774 = vmatmul.mubr.f32.gmra.mrb[0].mxu0 %v664
        %v775 = vpop.f32.mrb[0].mxu0
        %v776 = vadd.f32 0.0, %v775
        %v777 = vpop.f32.mrb[0].mxu0
        %778 = vdwg.mxu0
        %v779 = vadd.f32 %v583, %v736
        %v780 = vadd.f32 %v588, %v741
        %v781 = vadd.f32 %v593, %v746
        %v782 = vadd.f32 %v598, %v751
        %v783 = vadd.f32 %v603, %v756
        %v784 = vadd.f32 %v608, %v761
        %v785 = vadd.f32 %v613, %v766
        %v786 = vadd.f32 %v618, %v771
        %v787 = vadd.f32 %v623, %v776
        %s788 = scalar_lea.vmem %s2, 12
        %v789 = vld [vmem:[%s788] sm:$0xf]
        %vm790 = vcmask 1044480
        %v791 = vrot.slane %v319, 3
        %v792 = vrot.slane %v320, 3
        %v793 = vsel %vm790, %v791, %v792
        %v794 = vrot.slane %v321, 3
        %v795 = vsel %vm790, %v792, %v794
        %v796 = vrot.slane %v322, 3
        %v797 = vsel %vm790, %v794, %v796
        %v798 = vrot.slane %v323, 3
        %v799 = vsel %vm790, %v796, %v798
        %v800 = vrot.slane %v324, 3
        %v801 = vsel %vm790, %v798, %v800
        %v802 = vrot.slane %v325, 3
        %v803 = vsel %vm790, %v800, %v802
        %v804 = vrot.slane %v326, 3
        %v805 = vsel %vm790, %v802, %v804
        %v806 = vrot.slane %v327, 3
        %v807 = vsel %vm790, %v804, %v806
        %v808 = vrot.slane %v328, 3
        %v809 = vsel %vm790, %v806, %v808
        %v810 = vsel %vm362, %v793, 0
        %v812 = vsel %vm362, %v795, 0
        %v814 = vsel %vm362, %v797, 0
        %v816 = vsel %vm362, %v799, 0
        %v818 = vsel %vm362, %v801, 0
        %v820 = vsel %vm362, %v803, 0
        %v822 = vsel %vm362, %v805, 0
        %v824 = vsel %vm362, %v807, 0
        %v826 = vsel %vm362, %v809, 0
        %v829 = vsel %vm381, %v789, 0
        %831 = vmatprep.subr.mxu0 0.0
        %832 = vmatpush1.msra.mxu0 %v829
        %833 = vmatprep.subr.mxu0 0.0
        %834 = vmatpush1.msra.mxu0 0.0
        %835 = vmatprep.subr.mxu0 0.0
        %836 = vmatpush1.msra.mxu0 0.0
        %837 = vmatprep.subr.mxu0 0.0
        %838 = vmatpush1.msra.mxu0 0.0
        %839 = vmatprep.subr.mxu0 0.0
        %840 = vmatpush1.msra.mxu0 0.0
        %841 = vmatprep.subr.mxu0 0.0
        %842 = vmatpush1.msra.mxu0 0.0
        %843 = vmatprep.subr.mxu0 0.0
        %844 = vmatpush1.msra.mxu0 0.0
        %845 = vmatprep.subr.mxu0 0.0
        %846 = vmatpush1.msra.mxu0 0.0
        %847 = vmatprep.subr.mxu0 0.0
        %848 = vmatpush1.msra.mxu0 0.0
        %849 = vmatprep.subr.mxu0 0.0
        %850 = vmatpush1.msra.mxu0 0.0
        %851 = vmatprep.subr.mxu0 0.0
        %852 = vmatpush1.msra.mxu0 0.0
        %853 = vmatprep.subr.mxu0 0.0
        %854 = vmatpush1.msra.mxu0 0.0
        %855 = vmatprep.subr.mxu0 0.0
        %856 = vmatpush1.msra.mxu0 0.0
        %857 = vmatprep.subr.mxu0 0.0
        %858 = vmatpush1.msra.mxu0 0.0
        %859 = vmatprep.subr.mxu0 0.0
        %860 = vmatpush1.msra.mxu0 0.0
        %861 = vmatprep.subr.mxu0 0.0
        %862 = vmatpush1.msra.mxu0 0.0
        %863 = vmatprep.subr.mxu0 0.0
        %864 = vmatpush1.msra.mxu0 0.0
        %865 = vmatprep.subr.mxu0 0.0
        %866 = vmatpush1.msra.mxu0 0.0
        %867 = vmatprep.subr.mxu0 0.0
        %868 = vmatpush1.msra.mxu0 0.0
        %869 = vmatprep.subr.mxu0 0.0
        %870 = vmatpush1.msra.mxu0 0.0
        %871 = vmatprep.subr.mxu0 0.0
        %872 = vmatpush1.msra.mxu0 0.0
        %873 = vmatprep.subr.mxu0 0.0
        %874 = vmatpush1.msra.mxu0 0.0
        %875 = vmatprep.subr.mxu0 0.0
        %876 = vmatpush1.msra.mxu0 0.0
        %877 = vmatprep.subr.mxu0 0.0
        %878 = vmatpush1.msra.mxu0 0.0
        %879 = vmatprep.subr.mxu0 0.0
        %880 = vmatpush1.msra.mxu0 0.0
        %881 = vmatprep.subr.mxu0 0.0
        %882 = vmatpush1.msra.mxu0 0.0
        %883 = vmatprep.subr.mxu0 0.0
        %884 = vmatpush1.msra.mxu0 0.0
        %885 = vmatprep.subr.mxu0 0.0
        %886 = vmatpush1.msra.mxu0 0.0
        %887 = vmatprep.subr.mxu0 0.0
        %888 = vmatpush1.msra.mxu0 0.0
        %889 = vmatprep.subr.mxu0 0.0
        %890 = vmatpush1.msra.mxu0 0.0
        %891 = vmatprep.subr.mxu0 0.0
        %892 = vmatpush1.msra.mxu0 0.0
        %893 = vmatprep.subr.mxu0 0.0
        %894 = vmatpush1.msra.mxu0 0.0
        %895 = vmatprep.mubr.f32.mxu0 0.0
        %896 = vmatmul.mubr.f32.gmra.mrb[0].mxu0 %v810
        %v897 = vpop.f32.mrb[0].mxu0
        %v898 = vadd.f32 0.0, %v897
        %v899 = vpop.f32.mrb[0].mxu0
        %900 = vmatprep.mubr.f32.mxu0 0.0
        %901 = vmatmul.mubr.f32.gmra.mrb[0].mxu0 %v812
        %v902 = vpop.f32.mrb[0].mxu0
        %v903 = vadd.f32 0.0, %v902
        %v904 = vpop.f32.mrb[0].mxu0
        %905 = vmatprep.mubr.f32.mxu0 0.0
        %906 = vmatmul.mubr.f32.gmra.mrb[0].mxu0 %v814
        %v907 = vpop.f32.mrb[0].mxu0
        %v908 = vadd.f32 0.0, %v907
        %v909 = vpop.f32.mrb[0].mxu0
        %910 = vmatprep.mubr.f32.mxu0 0.0
        %911 = vmatmul.mubr.f32.gmra.mrb[0].mxu0 %v816
        %v912 = vpop.f32.mrb[0].mxu0
        %v913 = vadd.f32 0.0, %v912
        %v914 = vpop.f32.mrb[0].mxu0
        %915 = vmatprep.mubr.f32.mxu0 0.0
        %916 = vmatmul.mubr.f32.gmra.mrb[0].mxu0 %v818
        %v917 = vpop.f32.mrb[0].mxu0
        %v918 = vadd.f32 0.0, %v917
        %v919 = vpop.f32.mrb[0].mxu0
        %920 = vmatprep.mubr.f32.mxu0 0.0
        %921 = vmatmul.mubr.f32.gmra.mrb[0].mxu0 %v820
        %v922 = vpop.f32.mrb[0].mxu0
        %v923 = vadd.f32 0.0, %v922
        %v924 = vpop.f32.mrb[0].mxu0
        %925 = vmatprep.mubr.f32.mxu0 0.0
        %926 = vmatmul.mubr.f32.gmra.mrb[0].mxu0 %v822
        %v927 = vpop.f32.mrb[0].mxu0
        %v928 = vadd.f32 0.0, %v927
        %v929 = vpop.f32.mrb[0].mxu0
        %930 = vmatprep.mubr.f32.mxu0 0.0
        %931 = vmatmul.mubr.f32.gmra.mrb[0].mxu0 %v824
        %v932 = vpop.f32.mrb[0].mxu0
        %v933 = vadd.f32 0.0, %v932
        %v934 = vpop.f32.mrb[0].mxu0
        %935 = vmatprep.mubr.f32.mxu0 0.0
        %936 = vmatmul.mubr.f32.gmra.mrb[0].mxu0 %v826
        %v937 = vpop.f32.mrb[0].mxu0
        %v938 = vadd.f32 0.0, %v937
        %v939 = vpop.f32.mrb[0].mxu0
        %940 = vdwg.mxu0
        %v941 = vadd.f32 %v779, %v898
        %v942 = vadd.f32 %v780, %v903
        %v943 = vadd.f32 %v781, %v908
        %v944 = vadd.f32 %v782, %v913
        %v945 = vadd.f32 %v783, %v918
        %v946 = vadd.f32 %v784, %v923
        %v947 = vadd.f32 %v785, %v928
        %v948 = vadd.f32 %v786, %v933
        %v949 = vadd.f32 %v787, %v938
        %s950 = scalar_lea.vmem %s2, 16
        %v951 = vld [vmem:[%s950] sm:$0xf]
        %v952 = vrot.slane %v319, 4
        %v953 = vrot.slane %v320, 4
        %v954 = vsel %vm381, %v952, %v953
        %v955 = vrot.slane %v321, 4
        %v956 = vsel %vm381, %v953, %v955
        %v957 = vrot.slane %v322, 4
        %v958 = vsel %vm381, %v955, %v957
        %v959 = vrot.slane %v323, 4
        %v960 = vsel %vm381, %v957, %v959
        %v961 = vrot.slane %v324, 4
        %v962 = vsel %vm381, %v959, %v961
        %v963 = vrot.slane %v325, 4
        %v964 = vsel %vm381, %v961, %v963
        %v965 = vrot.slane %v326, 4
        %v966 = vsel %vm381, %v963, %v965
        %v967 = vrot.slane %v327, 4
        %v968 = vsel %vm381, %v965, %v967
        %v969 = vrot.slane %v328, 4
        %v970 = vsel %vm381, %v967, %v969
        %v971 = vsel %vm362, %v954, 0
        %v973 = vsel %vm362, %v956, 0
        %v975 = vsel %vm362, %v958, 0
        %v977 = vsel %vm362, %v960, 0
        %v979 = vsel %vm362, %v962, 0
        %v981 = vsel %vm362, %v964, 0
        %v983 = vsel %vm362, %v966, 0
        %v985 = vsel %vm362, %v968, 0
        %v987 = vsel %vm362, %v970, 0
        %v990 = vsel %vm381, %v951, 0
        %992 = vmatprep.subr.mxu0 0.0
        %993 = vmatpush1.msra.mxu0 %v990
        %994 = vmatprep.subr.mxu0 0.0
        %995 = vmatpush1.msra.mxu0 0.0
        %996 = vmatprep.subr.mxu0 0.0
        %997 = vmatpush1.msra.mxu0 0.0
        %998 = vmatprep.subr.mxu0 0.0
        %999 = vmatpush1.msra.mxu0 0.0
        %1000 = vmatprep.subr.mxu0 0.0
        %1001 = vmatpush1.msra.mxu0 0.0
        %1002 = vmatprep.subr.mxu0 0.0
        %1003 = vmatpush1.msra.mxu0 0.0
        %1004 = vmatprep.subr.mxu0 0.0
        %1005 = vmatpush1.msra.mxu0 0.0
        %1006 = vmatprep.subr.mxu0 0.0
        %1007 = vmatpush1.msra.mxu0 0.0
        %1008 = vmatprep.subr.mxu0 0.0
        %1009 = vmatpush1.msra.mxu0 0.0
        %1010 = vmatprep.subr.mxu0 0.0
        %1011 = vmatpush1.msra.mxu0 0.0
        %1012 = vmatprep.subr.mxu0 0.0
        %1013 = vmatpush1.msra.mxu0 0.0
        %1014 = vmatprep.subr.mxu0 0.0
        %1015 = vmatpush1.msra.mxu0 0.0
        %1016 = vmatprep.subr.mxu0 0.0
        %1017 = vmatpush1.msra.mxu0 0.0
        %1018 = vmatprep.subr.mxu0 0.0
        %1019 = vmatpush1.msra.mxu0 0.0
        %1020 = vmatprep.subr.mxu0 0.0
        %1021 = vmatpush1.msra.mxu0 0.0
        %1022 = vmatprep.subr.mxu0 0.0
        %1023 = vmatpush1.msra.mxu0 0.0
        %1024 = vmatprep.subr.mxu0 0.0
        %1025 = vmatpush1.msra.mxu0 0.0
        %1026 = vmatprep.subr.mxu0 0.0
        %1027 = vmatpush1.msra.mxu0 0.0
        %1028 = vmatprep.subr.mxu0 0.0
        %1029 = vmatpush1.msra.mxu0 0.0
        %1030 = vmatprep.subr.mxu0 0.0
        %1031 = vmatpush1.msra.mxu0 0.0
        %1032 = vmatprep.subr.mxu0 0.0
        %1033 = vmatpush1.msra.mxu0 0.0
        %1034 = vmatprep.subr.mxu0 0.0
        %1035 = vmatpush1.msra.mxu0 0.0
        %1036 = vmatprep.subr.mxu0 0.0
        %1037 = vmatpush1.msra.mxu0 0.0
        %1038 = vmatprep.subr.mxu0 0.0
        %1039 = vmatpush1.msra.mxu0 0.0
        %1040 = vmatprep.subr.mxu0 0.0
        %1041 = vmatpush1.msra.mxu0 0.0
        %1042 = vmatprep.subr.mxu0 0.0
        %1043 = vmatpush1.msra.mxu0 0.0
        %1044 = vmatprep.subr.mxu0 0.0
        %1045 = vmatpush1.msra.mxu0 0.0
        %1046 = vmatprep.subr.mxu0 0.0
        %1047 = vmatpush1.msra.mxu0 0.0
        %1048 = vmatprep.subr.mxu0 0.0
        %1049 = vmatpush1.msra.mxu0 0.0
        %1050 = vmatprep.subr.mxu0 0.0
        %1051 = vmatpush1.msra.mxu0 0.0
        %1052 = vmatprep.subr.mxu0 0.0
        %1053 = vmatpush1.msra.mxu0 0.0
        %1054 = vmatprep.subr.mxu0 0.0
        %1055 = vmatpush1.msra.mxu0 0.0
        %1056 = vmatprep.mubr.f32.mxu0 0.0
        %1057 = vmatmul.mubr.f32.gmra.mrb[0].mxu0 %v971
        %v1058 = vpop.f32.mrb[0].mxu0
        %v1059 = vadd.f32 0.0, %v1058
        %v1060 = vpop.f32.mrb[0].mxu0
        %1061 = vmatprep.mubr.f32.mxu0 0.0
        %1062 = vmatmul.mubr.f32.gmra.mrb[0].mxu0 %v973
        %v1063 = vpop.f32.mrb[0].mxu0
        %v1064 = vadd.f32 0.0, %v1063
        %v1065 = vpop.f32.mrb[0].mxu0
        %1066 = vmatprep.mubr.f32.mxu0 0.0
        %1067 = vmatmul.mubr.f32.gmra.mrb[0].mxu0 %v975
        %v1068 = vpop.f32.mrb[0].mxu0
        %v1069 = vadd.f32 0.0, %v1068
        %v1070 = vpop.f32.mrb[0].mxu0
        %1071 = vmatprep.mubr.f32.mxu0 0.0
        %1072 = vmatmul.mubr.f32.gmra.mrb[0].mxu0 %v977
        %v1073 = vpop.f32.mrb[0].mxu0
        %v1074 = vadd.f32 0.0, %v1073
        %v1075 = vpop.f32.mrb[0].mxu0
        %1076 = vmatprep.mubr.f32.mxu0 0.0
        %1077 = vmatmul.mubr.f32.gmra.mrb[0].mxu0 %v979
        %v1078 = vpop.f32.mrb[0].mxu0
        %v1079 = vadd.f32 0.0, %v1078
        %v1080 = vpop.f32.mrb[0].mxu0
        %1081 = vmatprep.mubr.f32.mxu0 0.0
        %1082 = vmatmul.mubr.f32.gmra.mrb[0].mxu0 %v981
        %v1083 = vpop.f32.mrb[0].mxu0
        %v1084 = vadd.f32 0.0, %v1083
        %v1085 = vpop.f32.mrb[0].mxu0
        %1086 = vmatprep.mubr.f32.mxu0 0.0
        %1087 = vmatmul.mubr.f32.gmra.mrb[0].mxu0 %v983
        %v1088 = vpop.f32.mrb[0].mxu0
        %v1089 = vadd.f32 0.0, %v1088
        %v1090 = vpop.f32.mrb[0].mxu0
        %1091 = vmatprep.mubr.f32.mxu0 0.0
        %1092 = vmatmul.mubr.f32.gmra.mrb[0].mxu0 %v985
        %v1093 = vpop.f32.mrb[0].mxu0
        %v1094 = vadd.f32 0.0, %v1093
        %v1095 = vpop.f32.mrb[0].mxu0
        %1096 = vmatprep.mubr.f32.mxu0 0.0
        %1097 = vmatmul.mubr.f32.gmra.mrb[0].mxu0 %v987
        %v1098 = vpop.f32.mrb[0].mxu0
        %v1099 = vadd.f32 0.0, %v1098
        %v1100 = vpop.f32.mrb[0].mxu0
        %1101 = vdwg.mxu0
        %v1102 = vadd.f32 %v941, %v1059
        %v1103 = vadd.f32 %v942, %v1064
        %v1104 = vadd.f32 %v943, %v1069
        %v1105 = vadd.f32 %v944, %v1074
        %v1106 = vadd.f32 %v945, %v1079
        %v1107 = vadd.f32 %v946, %v1084
        %v1108 = vadd.f32 %v947, %v1089
        %v1109 = vadd.f32 %v948, %v1094
        %v1110 = vadd.f32 %v949, %v1099
        %v1111 = vld [vmem:[%s3] sm:$0x1]
        %v1113 = vlaneseq
        %v1114 = vshrl.u32 %v1113, 7
        %v1115 = vsub.s32 0, %v1114
        %v1116 = vrot.slane %v1111, %v1115
        %v1118 = vmul.f32 %v1102, %v1116
        %v1119 = vmul.f32 %v1103, %v1116
        %v1120 = vmul.f32 %v1104, %v1116
        %v1121 = vmul.f32 %v1105, %v1116
        %v1122 = vmul.f32 %v1106, %v1116
        %v1123 = vmul.f32 %v1107, %v1116
        %v1124 = vmul.f32 %v1108, %v1116
        %v1125 = vmul.f32 %v1109, %v1116
        %v1126 = vmul.f32 %v1110, %v1116
        %v1127 = vld [vmem:[%s4] sm:$0x1]
        %v1129 = vlaneseq
        %v1130 = vshrl.u32 %v1129, 7
        %v1131 = vsub.s32 0, %v1130
        %v1132 = vrot.slane %v1127, %v1131
        %v1134 = vadd.f32 %v1118, %v1132
        %v1135 = vadd.f32 %v1119, %v1132
        %v1136 = vadd.f32 %v1120, %v1132
        %v1137 = vadd.f32 %v1121, %v1132
        %v1138 = vadd.f32 %v1122, %v1132
        %v1139 = vadd.f32 %v1123, %v1132
        %v1140 = vadd.f32 %v1124, %v1132
        %v1141 = vadd.f32 %v1125, %v1132
        %v1142 = vadd.f32 %v1126, %v1132
        %vm1143 = vcmp.gt.f32.partialorder %v1134, 0.0
        %vm1144 = vcmp.gt.f32.partialorder %v1135, 0.0
        %vm1145 = vcmp.gt.f32.partialorder %v1136, 0.0
        %vm1146 = vcmp.gt.f32.partialorder %v1137, 0.0
        %vm1147 = vcmp.gt.f32.partialorder %v1138, 0.0
        %vm1148 = vcmp.gt.f32.partialorder %v1139, 0.0
        %vm1149 = vcmp.gt.f32.partialorder %v1140, 0.0
        %vm1150 = vcmp.gt.f32.partialorder %v1141, 0.0
        %vm1151 = vcmp.gt.f32.partialorder %v1142, 0.0
        %v1152 = vmin.f32 %v1134, 0.0
        %v1153 = vmin.f32 %v1135, 0.0
        %v1154 = vmin.f32 %v1136, 0.0
        %v1155 = vmin.f32 %v1137, 0.0
        %v1156 = vmin.f32 %v1138, 0.0
        %v1157 = vmin.f32 %v1139, 0.0
        %v1158 = vmin.f32 %v1140, 0.0
        %v1159 = vmin.f32 %v1141, 0.0
        %v1160 = vmin.f32 %v1142, 0.0
        %v1161 = vmul.f32 %v1152, 1.442695
        %v1162 = vpow.pop %v1161
        %v1163 = vmul.f32 %v1153, 1.442695
        %v1164 = vpow.pop %v1163
        %v1165 = vmul.f32 %v1154, 1.442695
        %v1166 = vpow.pop %v1165
        %v1167 = vmul.f32 %v1155, 1.442695
        %v1168 = vpow.pop %v1167
        %v1169 = vmul.f32 %v1156, 1.442695
        %v1170 = vpow.pop %v1169
        %v1171 = vmul.f32 %v1157, 1.442695
        %v1172 = vpow.pop %v1171
        %v1173 = vmul.f32 %v1158, 1.442695
        %v1174 = vpow.pop %v1173
        %v1175 = vmul.f32 %v1159, 1.442695
        %v1176 = vpow.pop %v1175
        %v1177 = vmul.f32 %v1160, 1.442695
        %v1178 = vpow.pop %v1177
        %v1179 = vsub.f32 %v1162, 1.0
        %v1180 = vsub.f32 %v1164, 1.0
        %v1181 = vsub.f32 %v1166, 1.0
        %v1182 = vsub.f32 %v1168, 1.0
        %v1183 = vsub.f32 %v1170, 1.0
        %v1184 = vsub.f32 %v1172, 1.0
        %v1185 = vsub.f32 %v1174, 1.0
        %v1186 = vsub.f32 %v1176, 1.0
        %v1187 = vsub.f32 %v1178, 1.0
        %v1188 = vsel %vm1143, %v1134, %v1179
        %v1189 = vsel %vm1144, %v1135, %v1180
        %v1190 = vsel %vm1145, %v1136, %v1181
        %v1191 = vsel %vm1146, %v1137, %v1182
        %v1192 = vsel %vm1147, %v1138, %v1183
        %v1193 = vsel %vm1148, %v1139, %v1184
        %v1194 = vsel %vm1149, %v1140, %v1185
        %v1195 = vsel %vm1150, %v1141, %v1186
        %v1196 = vsel %vm1151, %v1142, %v1187
        %1197 = vst [vmem:[#allocation2] sm:$0xff] %v1188
        %1198 = vst [vmem:[#allocation2 + $0x8] sm:$0xff] %v1189
        %1199 = vst [vmem:[#allocation2 + $0x10] sm:$0xff] %v1190
        %1200 = vst [vmem:[#allocation2 + $0x18] sm:$0xff] %v1191
        %1201 = vst [vmem:[#allocation2 + $0x20] sm:$0xff] %v1192
        %1202 = vst [vmem:[#allocation2 + $0x28] sm:$0xff] %v1193
        %1203 = vst [vmem:[#allocation2 + $0x30] sm:$0xff] %v1194
        %1204 = vst [vmem:[#allocation2 + $0x38] sm:$0xff] %v1195
        %1205 = vst [vmem:[#allocation2 + $0x40] sm:$0xff] %v1196
        %v1206 = vld [vmem:[#allocation2] ss:$3 sm:$0xff]
        %s1207 = scalar_lea.vmem [#allocation2], 24
        %v1208 = vld [vmem:[%s1207] ss:$3 sm:$0xff]
        %s1209 = scalar_lea.vmem [#allocation2], 48
        %v1210 = vld [vmem:[%s1209] ss:$3 sm:$0xff]
        %s1211 = scalar_lea.vmem [#allocation2], 1
        %v1212 = vld [vmem:[%s1211] ss:$3 sm:$0xff]
        %s1213 = scalar_lea.vmem [#allocation2], 25
        %v1214 = vld [vmem:[%s1213] ss:$3 sm:$0xff]
        %s1215 = scalar_lea.vmem [#allocation2], 49
        %v1216 = vld [vmem:[%s1215] ss:$3 sm:$0xff]
        %v1217 = vmax.f32 %v1206, %v1212
        %v1218 = vmax.f32 %v1208, %v1214
        %v1219 = vmax.f32 %v1210, %v1216
        %s1220 = scalar_lea.vmem [#allocation2], 2
        %v1221 = vld [vmem:[%s1220] ss:$3 sm:$0xff]
        %s1222 = scalar_lea.vmem [#allocation2], 26
        %v1223 = vld [vmem:[%s1222] ss:$3 sm:$0xff]
        %s1224 = scalar_lea.vmem [#allocation2], 50
        %v1225 = vld [vmem:[%s1224] ss:$3 sm:$0xff]
        %v1226 = vmax.f32 %v1217, %v1221
        %v1227 = vmax.f32 %v1218, %v1223
        %v1228 = vmax.f32 %v1219, %v1225
        %1229 = vst [vmem:[%s287] sm:$0xff] %v1226
        %1230 = vst [vmem:[%s287 + $0x8] sm:$0xff] %v1227
        %1231 = vst [vmem:[%s287 + $0x10] sm:$0xff] %v1228
        %s1232 = sand.u32 %s164, 1
        %s1233 = scalar_lea.sflag [#allocation4], %s1232
        %s1234 = sand.u32 %s164, 1
        %s1235 = smul.addr %s1234, 24
        %s1236 = scalar_lea.vmem [#allocation3], %s1235
        // Predicated region
        $region41: #{tpu_custom_call.1} parent=39 // pred_check
          %p1237 = pneg %p174
        $region42: #{tpu_custom_call.1} parent=39 // pred_check_branch
          %1239 = sbr.rel (%p1237) target = $region44
        $region43: #{tpu_custom_call.1} parent=39 // pred_region
          %s1240 = smul.u32 3, %s24
          %s1242 = ssub.s32 384, 384
          %1243 = vsyncadd %s1233, %s1242
          %s1244 = smul.addr %s23, 3
          %s1245 = sadd.s32 %s1240, %s1244
          %s1246 = smul.addr %s1245, 128
          %s1247 = scalar_lea.hbm %s5, %s1246
          %s1248 = sshll.u32 %s1236, 4
          %s1249 = int_to_ptr.vmem [resolvable:$true] %s1248
          %1254 = dma.vmem_to_hbm [thread:$0]  %s1249, 384, %s1247, %s1233, 128, 128, 8
        $region44: #{tpu_custom_call.1} parent=39 // pred_fallthru
          _
      $region40: #{tpu_custom_call.1} parent=5 // pred_fallthru
        _
      %p1255 = scmp.le.s32.totalorder 2, %s14
      // Predicated region
      $region45: #{tpu_custom_call.1} parent=5 // pred_check
        %p1256 = pneg %p1255
      $region46: #{tpu_custom_call.1} parent=5 // pred_check_branch
        %1258 = sbr.rel (%p1256) target = $region48
      $region47: #{tpu_custom_call.1} parent=5 // pred_region
        %s1259 = ssub.s32 %s14, 2
        // Predicated region
        $region49: #{tpu_custom_call.1} parent=47 // pred_check
          %p1260 = pneg %p180
        $region50: #{tpu_custom_call.1} parent=47 // pred_check_branch
          %1262 = sbr.rel (%p1260) target = $region52
        $region51: #{tpu_custom_call.1} parent=47 // pred_region
          %s1263 = sand.u32 %s165, 1
          %s1264 = scalar_lea.sflag [#allocation4], %s1263
          %s1265 = sand.u32 %s165, 1
          %s1266 = smul.addr %s1265, 24
          %s1267 = scalar_lea.vmem [#allocation3], %s1266
          %1268 = dma.done %s1264, 384
        $region52: #{tpu_custom_call.1} parent=47 // pred_fallthru
          _
      $region48: #{tpu_custom_call.1} parent=5 // pred_fallthru
        _
    $region6: #{tpu_custom_call.1} parent=1 // loop_footer
      %s18 = sadd.s32 1, %s14
    $region7: #{tpu_custom_call.1} parent=1 // loop_footer_branch
      %13 = sbr.rel target = $region3
    $region8: #{tpu_custom_call.1} parent=1 // loop_exit
      _
    %1269 = vsyncpa [#allocation4], 1
    %s1270 = scalar_lea.sflag [#allocation4], 1
    %1271 = vsyncpa %s1270, 1

</llo_original>
